<compile_context>
chip_gen: v7x
topology: tpu7x:2x2x1
jax: 0.10.0
libtpu: 0.0.40
codegen_flags: <defaults>
</compile_context>

<pallas_src>
import jax
import jax.numpy as jnp
from jax import lax
from jax.experimental import pallas as pl
from jax.experimental.pallas import tpu as pltpu

EPS = 1e-5


def attention_block_kernel(g_ref, x_ref, wg_ref, wx_ref, wpsi_ref,
                           gamg_ref, betg_ref, gamx_ref, betx_ref,
                           gampsi_ref, betpsi_ref, out_ref):
    """Shapes: g (N,Fg,HW), x (N,Fl,HW), wg (Fi,Fg), wx (Fi,Fl), wpsi (Fi,1),
    gam*/bet* (Fi,1), gampsi/betpsi (1,1), out (N,Fl,HW)."""
    N, Fg, HW = g_ref.shape
    Fi = wg_ref.shape[0]
    inv_m = 1.0 / float(N * HW)

    # ---- 1x1 convs as per-batch (Fi,Cin)@(Cin,HW) MXU matmuls (lane axis = HW, dense).
    #      Conv biases dropped: cancelled by the training-mode BN mean subtraction. ----
    g1, x1 = [], []
    s_g = jnp.zeros((Fi, 1), jnp.float32)
    ss_g = jnp.zeros((Fi, 1), jnp.float32)
    s_x = jnp.zeros((Fi, 1), jnp.float32)
    ss_x = jnp.zeros((Fi, 1), jnp.float32)
    for n in range(N):
        gn = jnp.dot(wg_ref[...], g_ref[n], preferred_element_type=jnp.float32)
        xn = jnp.dot(wx_ref[...], x_ref[n], preferred_element_type=jnp.float32)
        g1.append(gn)
        x1.append(xn)
        # single-pass BN statistics: per-channel sum and sum-of-squares (lane reduce).
        s_g = s_g + jnp.sum(gn, axis=1, keepdims=True)
        ss_g = ss_g + jnp.sum(gn * gn, axis=1, keepdims=True)
        s_x = s_x + jnp.sum(xn, axis=1, keepdims=True)
        ss_x = ss_x + jnp.sum(xn * xn, axis=1, keepdims=True)

    # ---- fold BN (batch stats, biased variance) into one per-channel scale/shift ----
    mean_g = s_g * inv_m
    var_g = ss_g * inv_m - mean_g * mean_g
    scale_g = gamg_ref[...] * lax.rsqrt(var_g + EPS)
    shift_g = betg_ref[...] - mean_g * scale_g

    mean_x = s_x * inv_m
    var_x = ss_x * inv_m - mean_x * mean_x
    scale_x = gamx_ref[...] * lax.rsqrt(var_x + EPS)
    shift_x = betx_ref[...] - mean_x * scale_x

    # ---- psi pre-activation: ReLU(BN(g1)+BN(x1)) -> 1x1 conv to 1 channel ----
    p = []
    s_p = jnp.zeros((1, 1), jnp.float32)
    ss_p = jnp.zeros((1, 1), jnp.float32)
    for n in range(N):
        a = jnp.maximum(g1[n] * scale_g + shift_g + x1[n] * scale_x + shift_x, 0.0)
        pn = jnp.sum(a * wpsi_ref[...], axis=0, keepdims=True)      # (1, HW)
        p.append(pn)
        s_p = s_p + jnp.sum(pn, keepdims=True)
        ss_p = ss_p + jnp.sum(pn * pn, keepdims=True)

    mean_p = s_p * inv_m
    var_p = ss_p * inv_m - mean_p * mean_p
    scale_p = gampsi_ref[...] * lax.rsqrt(var_p + EPS)               # (1, 1)
    shift_p = betpsi_ref[...] - mean_p * scale_p

    # ---- sigmoid gate + gated output (lane-dense (Fl, HW) unmasked stores) ----
    for n in range(N):
        z = p[n] * scale_p + shift_p
        psi = 1.0 / (1.0 + jnp.exp(-z))                              # exp on EUP
        out_ref[n] = (x_ref[n] * psi).astype(out_ref.dtype)


def attention_block(g_nchw, x_nchw, params):
    """g: (N, F_g, H, W), x: (N, F_l, H, W) float32.  Returns (N, F_l, H, W)."""
    (wg, bg, gamma_g, beta_g,
     wx, bx, gamma_x, beta_x,
     wpsi, bpsi, gamma_psi, beta_psi) = params
    del bg, bx, bpsi  # exact no-ops under the training-mode BatchNorms that follow

    N, Fg, H, W = g_nchw.shape
    Fl = x_nchw.shape[1]
    Fi = wg.shape[0]
    HW = H * W

    # Flatten spatial only: pure reshape (no transpose / pad / extra HBM copy).
    g3 = g_nchw.reshape(N, Fg, HW)
    x3 = x_nchw.reshape(N, Fl, HW)

    wg2 = wg.reshape(Fi, Fg)                 # (Fi, Fg, 1, 1) -> (Fi, Fg)
    wx2 = wx.reshape(Fi, Fl)
    wpsi2 = wpsi.reshape(Fi, 1)              # (1, Fi, 1, 1) -> (Fi, 1)
    gamg = gamma_g.reshape(Fi, 1)
    betg = beta_g.reshape(Fi, 1)
    gamx = gamma_x.reshape(Fi, 1)
    betx = beta_x.reshape(Fi, 1)
    gampsi = gamma_psi.reshape(1, 1)
    betpsi = beta_psi.reshape(1, 1)

    vmem = pl.BlockSpec(memory_space=pltpu.MemorySpace.VMEM)

    # Advisory cost estimate for XLA's scheduler around the custom call.
    flops = 2 * N * HW * Fi * (Fg + Fl) + 2 * N * HW * Fi + 12 * N * HW * Fi
    bytes_accessed = 4 * (g3.size + x3.size + N * Fl * HW
                          + wg2.size + wx2.size + wpsi2.size + 4 * Fi + 2)
    cost = pl.CostEstimate(flops=int(flops), transcendentals=int(N * HW),
                           bytes_accessed=int(bytes_accessed))

    # Explicit VMEM budget: inputs + output + per-batch conv/ReLU intermediates, 2x headroom.
    working_set = 4 * (g3.size + x3.size + N * Fl * HW + 6 * N * Fi * HW) + 64 * 1024
    vmem_limit = min(max(2 * int(working_set), 4 * 1024 * 1024), 64 * 1024 * 1024)

    out3 = pl.pallas_call(
        attention_block_kernel,
        out_shape=jax.ShapeDtypeStruct((N, Fl, HW), jnp.float32),
        in_specs=[vmem] * 11,
        out_specs=vmem,
        compiler_params=pltpu.CompilerParams(vmem_limit_bytes=vmem_limit),
        cost_estimate=cost,
    )(g3, x3, wg2, wx2, wpsi2, gamg, betg, gamx, betx, gampsi, betpsi)

    return out3.reshape(N, Fl, H, W)


def ref_attention_block(g, x, params):
    """Pure-JAX reference matching the PyTorch AttentionBlock forward in train mode
    (includes the conv biases, two-pass BN statistics)."""
    (wg, bg, gamma_g, beta_g,
     wx, bx, gamma_x, beta_x,
     wpsi, bpsi, gamma_psi, beta_psi) = params

    def conv1x1(t, w, b):
        y = lax.conv_general_dilated(t, w, window_strides=(1, 1), padding="VALID",
                                     dimension_numbers=("NCHW", "OIHW", "NCHW"))
        return y + b[None, :, None, None]

    def bn(t, gamma, beta):
        mean = jnp.mean(t, axis=(0, 2, 3), keepdims=True)
        var = jnp.mean((t - mean) ** 2, axis=(0, 2, 3), keepdims=True)
        return ((t - mean) * lax.rsqrt(var + EPS) * gamma[None, :, None, None]
                + beta[None, :, None, None])

    g1 = bn(conv1x1(g, wg, bg), gamma_g, beta_g)
    x1 = bn(conv1x1(x, wx, bx), gamma_x, beta_x)
    a = jnp.maximum(g1 + x1, 0.0)
    psi = jax.nn.sigmoid(bn(conv1x1(a, wpsi, bpsi), gamma_psi, beta_psi))
    return x * psi


if __name__ == "__main__":
    N, F_g, F_l, F_int, H, W = 2, 4, 4, 32, 16, 16

    key = jax.random.PRNGKey(0)
    ks = jax.random.split(key, 14)
    g = jax.random.normal(ks[0], (N, F_g, H, W), jnp.float32)
    x = jax.random.normal(ks[1], (N, F_l, H, W), jnp.float32)

    # Deterministic synthetic parameters (shapes from nn.Conv2d / nn.BatchNorm2d).
    wg = jax.random.normal(ks[2], (F_int, F_g, 1, 1), jnp.float32) * 0.2
    bg = jax.random.normal(ks[3], (F_int,), jnp.float32) * 0.1
    gamma_g = 1.0 + 0.1 * jax.random.normal(ks[4], (F_int,), jnp.float32)
    beta_g = 0.1 * jax.random.normal(ks[5], (F_int,), jnp.float32)

    wx = jax.random.normal(ks[6], (F_int, F_l, 1, 1), jnp.float32) * 0.2
    bx = jax.random.normal(ks[7], (F_int,), jnp.float32) * 0.1
    gamma_x = 1.0 + 0.1 * jax.random.normal(ks[8], (F_int,), jnp.float32)
    beta_x = 0.1 * jax.random.normal(ks[9], (F_int,), jnp.float32)

    wpsi = jax.random.normal(ks[10], (1, F_int, 1, 1), jnp.float32) * 0.2
    bpsi = jax.random.normal(ks[11], (1,), jnp.float32) * 0.1
    gamma_psi = 1.0 + 0.1 * jax.random.normal(ks[12], (1,), jnp.float32)
    beta_psi = 0.1 * jax.random.normal(ks[13], (1,), jnp.float32)

    params = (wg, bg, gamma_g, beta_g, wx, bx, gamma_x, beta_x,
              wpsi, bpsi, gamma_psi, beta_psi)

    out = jax.block_until_ready(attention_block(g, x, params))
    ref = jax.block_until_ready(ref_attention_block(g, x, params))

    assert out.shape == (N, F_l, H, W)
    assert jnp.allclose(out, ref, atol=1e-3, rtol=1e-3), \
        float(jnp.max(jnp.abs(out - ref)))
    print("KERNEL_OK")
</pallas_src>

<mosaic_0001>
module attributes {stable_mosaic.version = 11 : i64} {
  func.func @attention_block_kernel(%arg0: memref<2x4x256xf32, #tpu.memory_space<vmem>>, %arg1: memref<2x4x256xf32, #tpu.memory_space<vmem>>, %arg2: memref<32x4xf32, #tpu.memory_space<vmem>>, %arg3: memref<32x4xf32, #tpu.memory_space<vmem>>, %arg4: memref<32x1xf32, #tpu.memory_space<vmem>>, %arg5: memref<32x1xf32, #tpu.memory_space<vmem>>, %arg6: memref<32x1xf32, #tpu.memory_space<vmem>>, %arg7: memref<32x1xf32, #tpu.memory_space<vmem>>, %arg8: memref<32x1xf32, #tpu.memory_space<vmem>>, %arg9: memref<1x1xf32, #tpu.memory_space<vmem>>, %arg10: memref<1x1xf32, #tpu.memory_space<vmem>>, %arg11: memref<2x4x256xf32, #tpu.memory_space<vmem>>) attributes {dimension_semantics = [], scalar_prefetch = 0 : i64, scratch_operands = 0 : i64, tpu.core_type = #tpu.core_type<tc>} {
    %cst = arith.constant 0.000000e+00 : f32
    %0 = vector.broadcast %cst : f32 to vector<32x1xf32>
    %cst_0 = arith.constant 0.000000e+00 : f32
    %1 = vector.broadcast %cst_0 : f32 to vector<32x1xf32>
    %cst_1 = arith.constant 0.000000e+00 : f32
    %2 = vector.broadcast %cst_1 : f32 to vector<32x1xf32>
    %cst_2 = arith.constant 0.000000e+00 : f32
    %3 = vector.broadcast %cst_2 : f32 to vector<32x1xf32>
    %c0 = arith.constant 0 : index
    %c0_3 = arith.constant 0 : index
    %4 = vector.load %arg2[%c0, %c0_3] : memref<32x4xf32, #tpu.memory_space<vmem>>, vector<32x4xf32>
    %c0_4 = arith.constant 0 : index
    %c0_5 = arith.constant 0 : index
    %c0_6 = arith.constant 0 : index
    %5 = vector.load %arg0[%c0_4, %c0_5, %c0_6] : memref<2x4x256xf32, #tpu.memory_space<vmem>>, vector<1x4x256xf32>
    %6 = vector.shape_cast %5 : vector<1x4x256xf32> to vector<4x256xf32>
    %cst_7 = arith.constant dense<0.000000e+00> : vector<32x256xf32>
    %7 = tpu.matmul %4, %6, %cst_7 {dimension_numbers = #tpu.dot_dimension_numbers<[1], [0], [0], [1], [0, 0, 1, 1], [], []>} : vector<32x4xf32>, vector<4x256xf32>, vector<32x256xf32> -> vector<32x256xf32>
    %c0_8 = arith.constant 0 : index
    %c0_9 = arith.constant 0 : index
    %8 = vector.load %arg3[%c0_8, %c0_9] : memref<32x4xf32, #tpu.memory_space<vmem>>, vector<32x4xf32>
    %c0_10 = arith.constant 0 : index
    %c0_11 = arith.constant 0 : index
    %c0_12 = arith.constant 0 : index
    %9 = vector.load %arg1[%c0_10, %c0_11, %c0_12] : memref<2x4x256xf32, #tpu.memory_space<vmem>>, vector<1x4x256xf32>
    %10 = vector.shape_cast %9 : vector<1x4x256xf32> to vector<4x256xf32>
    %cst_13 = arith.constant dense<0.000000e+00> : vector<32x256xf32>
    %11 = tpu.matmul %8, %10, %cst_13 {dimension_numbers = #tpu.dot_dimension_numbers<[1], [0], [0], [1], [0, 0, 1, 1], [], []>} : vector<32x4xf32>, vector<4x256xf32>, vector<32x256xf32> -> vector<32x256xf32>
    %cst_14 = arith.constant dense<0.000000e+00> : vector<32xf32>
    %12 = vector.multi_reduction <add>, %7, %cst_14 [1] : vector<32x256xf32> to vector<32xf32>
    %13 = vector.shape_cast %12 : vector<32xf32> to vector<32x1xf32>
    %14 = arith.addf %0, %13 : vector<32x1xf32>
    %15 = arith.mulf %7, %7 : vector<32x256xf32>
    %cst_15 = arith.constant dense<0.000000e+00> : vector<32xf32>
    %16 = vector.multi_reduction <add>, %15, %cst_15 [1] : vector<32x256xf32> to vector<32xf32>
    %17 = vector.shape_cast %16 : vector<32xf32> to vector<32x1xf32>
    %18 = arith.addf %1, %17 : vector<32x1xf32>
    %cst_16 = arith.constant dense<0.000000e+00> : vector<32xf32>
    %19 = vector.multi_reduction <add>, %11, %cst_16 [1] : vector<32x256xf32> to vector<32xf32>
    %20 = vector.shape_cast %19 : vector<32xf32> to vector<32x1xf32>
    %21 = arith.addf %2, %20 : vector<32x1xf32>
    %22 = arith.mulf %11, %11 : vector<32x256xf32>
    %cst_17 = arith.constant dense<0.000000e+00> : vector<32xf32>
    %23 = vector.multi_reduction <add>, %22, %cst_17 [1] : vector<32x256xf32> to vector<32xf32>
    %24 = vector.shape_cast %23 : vector<32xf32> to vector<32x1xf32>
    %25 = arith.addf %3, %24 : vector<32x1xf32>
    %c0_18 = arith.constant 0 : index
    %c0_19 = arith.constant 0 : index
    %26 = vector.load %arg2[%c0_18, %c0_19] : memref<32x4xf32, #tpu.memory_space<vmem>>, vector<32x4xf32>
    %c1 = arith.constant 1 : index
    %c0_20 = arith.constant 0 : index
    %c0_21 = arith.constant 0 : index
    %27 = vector.load %arg0[%c1, %c0_20, %c0_21] : memref<2x4x256xf32, #tpu.memory_space<vmem>>, vector<1x4x256xf32>
    %28 = vector.shape_cast %27 : vector<1x4x256xf32> to vector<4x256xf32>
    %cst_22 = arith.constant dense<0.000000e+00> : vector<32x256xf32>
    %29 = tpu.matmul %26, %28, %cst_22 {dimension_numbers = #tpu.dot_dimension_numbers<[1], [0], [0], [1], [0, 0, 1, 1], [], []>} : vector<32x4xf32>, vector<4x256xf32>, vector<32x256xf32> -> vector<32x256xf32>
    %c0_23 = arith.constant 0 : index
    %c0_24 = arith.constant 0 : index
    %30 = vector.load %arg3[%c0_23, %c0_24] : memref<32x4xf32, #tpu.memory_space<vmem>>, vector<32x4xf32>
    %c1_25 = arith.constant 1 : index
    %c0_26 = arith.constant 0 : index
    %c0_27 = arith.constant 0 : index
    %31 = vector.load %arg1[%c1_25, %c0_26, %c0_27] : memref<2x4x256xf32, #tpu.memory_space<vmem>>, vector<1x4x256xf32>
    %32 = vector.shape_cast %31 : vector<1x4x256xf32> to vector<4x256xf32>
    %cst_28 = arith.constant dense<0.000000e+00> : vector<32x256xf32>
    %33 = tpu.matmul %30, %32, %cst_28 {dimension_numbers = #tpu.dot_dimension_numbers<[1], [0], [0], [1], [0, 0, 1, 1], [], []>} : vector<32x4xf32>, vector<4x256xf32>, vector<32x256xf32> -> vector<32x256xf32>
    %cst_29 = arith.constant dense<0.000000e+00> : vector<32xf32>
    %34 = vector.multi_reduction <add>, %29, %cst_29 [1] : vector<32x256xf32> to vector<32xf32>
    %35 = vector.shape_cast %34 : vector<32xf32> to vector<32x1xf32>
    %36 = arith.addf %14, %35 : vector<32x1xf32>
    %37 = arith.mulf %29, %29 : vector<32x256xf32>
    %cst_30 = arith.constant dense<0.000000e+00> : vector<32xf32>
    %38 = vector.multi_reduction <add>, %37, %cst_30 [1] : vector<32x256xf32> to vector<32xf32>
    %39 = vector.shape_cast %38 : vector<32xf32> to vector<32x1xf32>
    %40 = arith.addf %18, %39 : vector<32x1xf32>
    %cst_31 = arith.constant dense<0.000000e+00> : vector<32xf32>
    %41 = vector.multi_reduction <add>, %33, %cst_31 [1] : vector<32x256xf32> to vector<32xf32>
    %42 = vector.shape_cast %41 : vector<32xf32> to vector<32x1xf32>
    %43 = arith.addf %21, %42 : vector<32x1xf32>
    %44 = arith.mulf %33, %33 : vector<32x256xf32>
    %cst_32 = arith.constant dense<0.000000e+00> : vector<32xf32>
    %45 = vector.multi_reduction <add>, %44, %cst_32 [1] : vector<32x256xf32> to vector<32xf32>
    %46 = vector.shape_cast %45 : vector<32xf32> to vector<32x1xf32>
    %47 = arith.addf %25, %46 : vector<32x1xf32>
    %cst_33 = arith.constant 0.001953125 : f32
    %48 = vector.broadcast %cst_33 : f32 to vector<32x1xf32>
    %49 = arith.mulf %36, %48 : vector<32x1xf32>
    %cst_34 = arith.constant 0.001953125 : f32
    %50 = vector.broadcast %cst_34 : f32 to vector<32x1xf32>
    %51 = arith.mulf %40, %50 : vector<32x1xf32>
    %52 = arith.mulf %49, %49 : vector<32x1xf32>
    %53 = arith.subf %51, %52 : vector<32x1xf32>
    %c0_35 = arith.constant 0 : index
    %c0_36 = arith.constant 0 : index
    %54 = vector.load %arg5[%c0_35, %c0_36] : memref<32x1xf32, #tpu.memory_space<vmem>>, vector<32x1xf32>
    %cst_37 = arith.constant 9.99999974E-6 : f32
    %55 = vector.broadcast %cst_37 : f32 to vector<32x1xf32>
    %56 = arith.addf %53, %55 : vector<32x1xf32>
    %57 = math.rsqrt %56 : vector<32x1xf32>
    %58 = arith.mulf %54, %57 : vector<32x1xf32>
    %c0_38 = arith.constant 0 : index
    %c0_39 = arith.constant 0 : index
    %59 = vector.load %arg6[%c0_38, %c0_39] : memref<32x1xf32, #tpu.memory_space<vmem>>, vector<32x1xf32>
    %60 = arith.mulf %49, %58 : vector<32x1xf32>
    %61 = arith.subf %59, %60 : vector<32x1xf32>
    %cst_40 = arith.constant 0.001953125 : f32
    %62 = vector.broadcast %cst_40 : f32 to vector<32x1xf32>
    %63 = arith.mulf %43, %62 : vector<32x1xf32>
    %cst_41 = arith.constant 0.001953125 : f32
    %64 = vector.broadcast %cst_41 : f32 to vector<32x1xf32>
    %65 = arith.mulf %47, %64 : vector<32x1xf32>
    %66 = arith.mulf %63, %63 : vector<32x1xf32>
    %67 = arith.subf %65, %66 : vector<32x1xf32>
    %c0_42 = arith.constant 0 : index
    %c0_43 = arith.constant 0 : index
    %68 = vector.load %arg7[%c0_42, %c0_43] : memref<32x1xf32, #tpu.memory_space<vmem>>, vector<32x1xf32>
    %cst_44 = arith.constant 9.99999974E-6 : f32
    %69 = vector.broadcast %cst_44 : f32 to vector<32x1xf32>
    %70 = arith.addf %67, %69 : vector<32x1xf32>
    %71 = math.rsqrt %70 : vector<32x1xf32>
    %72 = arith.mulf %68, %71 : vector<32x1xf32>
    %c0_45 = arith.constant 0 : index
    %c0_46 = arith.constant 0 : index
    %73 = vector.load %arg8[%c0_45, %c0_46] : memref<32x1xf32, #tpu.memory_space<vmem>>, vector<32x1xf32>
    %74 = arith.mulf %63, %72 : vector<32x1xf32>
    %75 = arith.subf %73, %74 : vector<32x1xf32>
    %cst_47 = arith.constant 0.000000e+00 : f32
    %76 = vector.broadcast %cst_47 : f32 to vector<1x1xf32>
    %cst_48 = arith.constant 0.000000e+00 : f32
    %77 = vector.broadcast %cst_48 : f32 to vector<1x1xf32>
    %78 = vector.broadcast %58 : vector<32x1xf32> to vector<32x256xf32>
    %79 = arith.mulf %7, %78 : vector<32x256xf32>
    %80 = vector.broadcast %61 : vector<32x1xf32> to vector<32x256xf32>
    %81 = arith.addf %79, %80 : vector<32x256xf32>
    %82 = vector.broadcast %72 : vector<32x1xf32> to vector<32x256xf32>
    %83 = arith.mulf %11, %82 : vector<32x256xf32>
    %84 = arith.addf %81, %83 : vector<32x256xf32>
    %85 = vector.broadcast %75 : vector<32x1xf32> to vector<32x256xf32>
    %86 = arith.addf %84, %85 : vector<32x256xf32>
    %cst_49 = arith.constant 0.000000e+00 : f32
    %87 = vector.broadcast %cst_49 : f32 to vector<32x256xf32>
    %88 = arith.maximumf %86, %87 : vector<32x256xf32>
    %c0_50 = arith.constant 0 : index
    %c0_51 = arith.constant 0 : index
    %89 = vector.load %arg4[%c0_50, %c0_51] : memref<32x1xf32, #tpu.memory_space<vmem>>, vector<32x1xf32>
    %90 = vector.broadcast %89 : vector<32x1xf32> to vector<32x256xf32>
    %91 = arith.mulf %88, %90 : vector<32x256xf32>
    %cst_52 = arith.constant dense<0.000000e+00> : vector<256xf32>
    %92 = vector.multi_reduction <add>, %91, %cst_52 [0] : vector<32x256xf32> to vector<256xf32>
    %93 = vector.shape_cast %92 : vector<256xf32> to vector<1x256xf32>
    %94 = vector.shape_cast %93 : vector<1x256xf32> to vector<1x1x256xf32>
    %cst_53 = arith.constant dense<0.000000e+00> : vector<1xf32>
    %95 = vector.multi_reduction <add>, %94, %cst_53 [1, 2] : vector<1x1x256xf32> to vector<1xf32>
    %96 = vector.shape_cast %95 : vector<1xf32> to vector<1x1x1xf32>
    %97 = vector.extract %96[0, 0, 0] : f32 from vector<1x1x1xf32>
    %98 = vector.broadcast %97 : f32 to vector<1x1xf32>
    %99 = arith.addf %76, %98 : vector<1x1xf32>
    %100 = arith.mulf %93, %93 : vector<1x256xf32>
    %101 = vector.shape_cast %100 : vector<1x256xf32> to vector<1x1x256xf32>
    %cst_54 = arith.constant dense<0.000000e+00> : vector<1xf32>
    %102 = vector.multi_reduction <add>, %101, %cst_54 [1, 2] : vector<1x1x256xf32> to vector<1xf32>
    %103 = vector.shape_cast %102 : vector<1xf32> to vector<1x1x1xf32>
    %104 = vector.extract %103[0, 0, 0] : f32 from vector<1x1x1xf32>
    %105 = vector.broadcast %104 : f32 to vector<1x1xf32>
    %106 = arith.addf %77, %105 : vector<1x1xf32>
    %107 = vector.broadcast %58 : vector<32x1xf32> to vector<32x256xf32>
    %108 = arith.mulf %29, %107 : vector<32x256xf32>
    %109 = vector.broadcast %61 : vector<32x1xf32> to vector<32x256xf32>
    %110 = arith.addf %108, %109 : vector<32x256xf32>
    %111 = vector.broadcast %72 : vector<32x1xf32> to vector<32x256xf32>
    %112 = arith.mulf %33, %111 : vector<32x256xf32>
    %113 = arith.addf %110, %112 : vector<32x256xf32>
    %114 = vector.broadcast %75 : vector<32x1xf32> to vector<32x256xf32>
    %115 = arith.addf %113, %114 : vector<32x256xf32>
    %cst_55 = arith.constant 0.000000e+00 : f32
    %116 = vector.broadcast %cst_55 : f32 to vector<32x256xf32>
    %117 = arith.maximumf %115, %116 : vector<32x256xf32>
    %c0_56 = arith.constant 0 : index
    %c0_57 = arith.constant 0 : index
    %118 = vector.load %arg4[%c0_56, %c0_57] : memref<32x1xf32, #tpu.memory_space<vmem>>, vector<32x1xf32>
    %119 = vector.broadcast %118 : vector<32x1xf32> to vector<32x256xf32>
    %120 = arith.mulf %117, %119 : vector<32x256xf32>
    %cst_58 = arith.constant dense<0.000000e+00> : vector<256xf32>
    %121 = vector.multi_reduction <add>, %120, %cst_58 [0] : vector<32x256xf32> to vector<256xf32>
    %122 = vector.shape_cast %121 : vector<256xf32> to vector<1x256xf32>
    %123 = vector.shape_cast %122 : vector<1x256xf32> to vector<1x1x256xf32>
    %cst_59 = arith.constant dense<0.000000e+00> : vector<1xf32>
    %124 = vector.multi_reduction <add>, %123, %cst_59 [1, 2] : vector<1x1x256xf32> to vector<1xf32>
    %125 = vector.shape_cast %124 : vector<1xf32> to vector<1x1x1xf32>
    %126 = vector.extract %125[0, 0, 0] : f32 from vector<1x1x1xf32>
    %127 = vector.broadcast %126 : f32 to vector<1x1xf32>
    %128 = arith.addf %99, %127 : vector<1x1xf32>
    %129 = arith.mulf %122, %122 : vector<1x256xf32>
    %130 = vector.shape_cast %129 : vector<1x256xf32> to vector<1x1x256xf32>
    %cst_60 = arith.constant dense<0.000000e+00> : vector<1xf32>
    %131 = vector.multi_reduction <add>, %130, %cst_60 [1, 2] : vector<1x1x256xf32> to vector<1xf32>
    %132 = vector.shape_cast %131 : vector<1xf32> to vector<1x1x1xf32>
    %133 = vector.extract %132[0, 0, 0] : f32 from vector<1x1x1xf32>
    %134 = vector.broadcast %133 : f32 to vector<1x1xf32>
    %135 = arith.addf %106, %134 : vector<1x1xf32>
    %cst_61 = arith.constant 0.001953125 : f32
    %136 = vector.broadcast %cst_61 : f32 to vector<1x1xf32>
    %137 = arith.mulf %128, %136 : vector<1x1xf32>
    %cst_62 = arith.constant 0.001953125 : f32
    %138 = vector.broadcast %cst_62 : f32 to vector<1x1xf32>
    %139 = arith.mulf %135, %138 : vector<1x1xf32>
    %140 = arith.mulf %137, %137 : vector<1x1xf32>
    %141 = arith.subf %139, %140 : vector<1x1xf32>
    %c0_63 = arith.constant 0 : index
    %c0_64 = arith.constant 0 : index
    %142 = vector.load %arg9[%c0_63, %c0_64] : memref<1x1xf32, #tpu.memory_space<vmem>>, vector<1x1xf32>
    %cst_65 = arith.constant 9.99999974E-6 : f32
    %143 = vector.broadcast %cst_65 : f32 to vector<1x1xf32>
    %144 = arith.addf %141, %143 : vector<1x1xf32>
    %145 = math.rsqrt %144 : vector<1x1xf32>
    %146 = arith.mulf %142, %145 : vector<1x1xf32>
    %c0_66 = arith.constant 0 : index
    %c0_67 = arith.constant 0 : index
    %147 = vector.load %arg10[%c0_66, %c0_67] : memref<1x1xf32, #tpu.memory_space<vmem>>, vector<1x1xf32>
    %148 = arith.mulf %137, %146 : vector<1x1xf32>
    %149 = arith.subf %147, %148 : vector<1x1xf32>
    %150 = vector.broadcast %146 : vector<1x1xf32> to vector<1x256xf32>
    %151 = arith.mulf %93, %150 : vector<1x256xf32>
    %152 = vector.broadcast %149 : vector<1x1xf32> to vector<1x256xf32>
    %153 = arith.addf %151, %152 : vector<1x256xf32>
    %cst_68 = arith.constant 0.000000e+00 : f32
    %154 = vector.broadcast %cst_68 : f32 to vector<1x256xf32>
    %155 = arith.subf %154, %153 : vector<1x256xf32>
    %156 = math.exp %155 : vector<1x256xf32>
    %cst_69 = arith.constant 1.000000e+00 : f32
    %157 = vector.broadcast %cst_69 : f32 to vector<1x256xf32>
    %158 = arith.addf %157, %156 : vector<1x256xf32>
    %cst_70 = arith.constant 1.000000e+00 : f32
    %159 = vector.broadcast %cst_70 : f32 to vector<1x256xf32>
    %160 = arith.divf %159, %158 : vector<1x256xf32>
    %c0_71 = arith.constant 0 : index
    %c0_72 = arith.constant 0 : index
    %c0_73 = arith.constant 0 : index
    %161 = vector.load %arg1[%c0_71, %c0_72, %c0_73] : memref<2x4x256xf32, #tpu.memory_space<vmem>>, vector<1x4x256xf32>
    %162 = vector.shape_cast %161 : vector<1x4x256xf32> to vector<4x256xf32>
    %163 = vector.broadcast %160 : vector<1x256xf32> to vector<4x256xf32>
    %164 = arith.mulf %162, %163 : vector<4x256xf32>
    %c0_74 = arith.constant 0 : index
    %c0_75 = arith.constant 0 : index
    %c0_76 = arith.constant 0 : index
    %165 = vector.load %arg11[%c0_74, %c0_75, %c0_76] : memref<2x4x256xf32, #tpu.memory_space<vmem>>, vector<1x4x256xf32>
    %166 = vector.shape_cast %165 : vector<1x4x256xf32> to vector<4x256xf32>
    %167 = vector.shape_cast %164 : vector<4x256xf32> to vector<1x4x256xf32>
    tpu.vector_store %arg11[%c0_74, %c0_75, %c0_76], %167 {strides = array<i32>} : memref<2x4x256xf32, #tpu.memory_space<vmem>>, vector<1x4x256xf32>,
    %168 = vector.broadcast %146 : vector<1x1xf32> to vector<1x256xf32>
    %169 = arith.mulf %122, %168 : vector<1x256xf32>
    %170 = vector.broadcast %149 : vector<1x1xf32> to vector<1x256xf32>
    %171 = arith.addf %169, %170 : vector<1x256xf32>
    %cst_77 = arith.constant 0.000000e+00 : f32
    %172 = vector.broadcast %cst_77 : f32 to vector<1x256xf32>
    %173 = arith.subf %172, %171 : vector<1x256xf32>
    %174 = math.exp %173 : vector<1x256xf32>
    %cst_78 = arith.constant 1.000000e+00 : f32
    %175 = vector.broadcast %cst_78 : f32 to vector<1x256xf32>
    %176 = arith.addf %175, %174 : vector<1x256xf32>
    %cst_79 = arith.constant 1.000000e+00 : f32
    %177 = vector.broadcast %cst_79 : f32 to vector<1x256xf32>
    %178 = arith.divf %177, %176 : vector<1x256xf32>
    %c1_80 = arith.constant 1 : index
    %c0_81 = arith.constant 0 : index
    %c0_82 = arith.constant 0 : index
    %179 = vector.load %arg1[%c1_80, %c0_81, %c0_82] : memref<2x4x256xf32, #tpu.memory_space<vmem>>, vector<1x4x256xf32>
    %180 = vector.shape_cast %179 : vector<1x4x256xf32> to vector<4x256xf32>
    %181 = vector.broadcast %178 : vector<1x256xf32> to vector<4x256xf32>
    %182 = arith.mulf %180, %181 : vector<4x256xf32>
    %c1_83 = arith.constant 1 : index
    %c0_84 = arith.constant 0 : index
    %c0_85 = arith.constant 0 : index
    %183 = vector.load %arg11[%c1_83, %c0_84, %c0_85] : memref<2x4x256xf32, #tpu.memory_space<vmem>>, vector<1x4x256xf32>
    %184 = vector.shape_cast %183 : vector<1x4x256xf32> to vector<4x256xf32>
    %185 = vector.shape_cast %182 : vector<4x256xf32> to vector<1x4x256xf32>
    tpu.vector_store %arg11[%c1_83, %c0_84, %c0_85], %185 {strides = array<i32>} : memref<2x4x256xf32, #tpu.memory_space<vmem>>, vector<1x4x256xf32>,
    return
  }
}

</mosaic_0001>

<llo_original>
// kernel: tpu_custom_call.1
$region0: #{tpu_custom_call.1}
  #allocation0 [shape = 'u32[]', space=smem, size = 0x4, offset = 0x4, fixed_abs, tag = 'smem constant byte address 0x4 - core index']
  #allocation1 [shape = 'u32[144,128]{1,0:T(1,128)}', space=vmem, size = 0x12000, scoped, tag = 'internal scratch']
  #allocation2 [shape = 'f32[1,1]{1,0:T(1,128)S(1)}', space=vmem, size = 0x200, scoped, tag = 'scoped memory for tpu_custom_call.1']
  #allocation3 [shape = 'f32[1,1]{1,0:T(1,128)S(1)}', space=vmem, size = 0x200, scoped, tag = 'scoped memory for tpu_custom_call.1']
  %s0 = inlined_call_operand.vmem [shape: f32[2,4,256], index: 0, kind: input, shape index: {}]
  %s1 = inlined_call_operand.vmem [shape: f32[2,4,256], index: 1, kind: input, shape index: {}]
  %s2 = inlined_call_operand.vmem [shape: f32[32,4], index: 2, kind: input, shape index: {}]
  %s3 = inlined_call_operand.vmem [shape: f32[32,4], index: 3, kind: input, shape index: {}]
  %s4 = inlined_call_operand.vmem [shape: f32[32,1], index: 4, kind: input, shape index: {}]
  %s5 = inlined_call_operand.vmem [shape: f32[32,1], index: 5, kind: input, shape index: {}]
  %s6 = inlined_call_operand.vmem [shape: f32[32,1], index: 6, kind: input, shape index: {}]
  %s7 = inlined_call_operand.vmem [shape: f32[32,1], index: 7, kind: input, shape index: {}]
  %s8 = inlined_call_operand.vmem [shape: f32[32,1], index: 8, kind: input, shape index: {}]
  %s9 = inlined_call_operand.<no memory space> [shape: f32[1,1], index: 9, kind: input, shape index: {}]
  %s10 = inlined_call_operand.<no memory space> [shape: f32[1,1], index: 10, kind: input, shape index: {}]
  %s11 = inlined_call_operand.hbm [shape: f32[2,4,256], index: 11, kind: output, shape index: {}]
  %s12 = sld [smem:[#allocation0]]
  $region54: #{tpu_custom_call.1} parent=0
    _
  %s14 = ssub.s32 1, %s12
  %s15 = scalar_select 0, %s14, %s12
  %v16 = vstv %s9
  %17 = vst [vmem:[#allocation2] sm:$0x1] %v16
  %v18 = vstv %s10
  %19 = vst [vmem:[#allocation3] sm:$0x1] %v18
  $region1: #{tpu_custom_call.1} parent=0
    #allocation4 [shape = 'u8[8192]{0}', space=vmem, size = 0x2000, scoped, tag = 'output window, operand 0, single buffered']
    #allocation5 [shape = 's32[1]{0}', space=sflag, size = 0x4, scoped, tag = 'scoped memory for tpu_custom_call.1']
    %20 = vsyncpa [#allocation5], 0
    // Predicated region
    $region2: #{tpu_custom_call.1} parent=1 // pred_check
      _
    $region3: #{tpu_custom_call.1} parent=1 // pred_check_branch
      %22 = sbr.rel (0) target = $region5
    $region4: #{tpu_custom_call.1} parent=1 // pred_region
      _
    $region5: #{tpu_custom_call.1} parent=1 // pred_fallthru
      _
    // Predicated region
    $region6: #{tpu_custom_call.1} parent=1 // pred_check
      _
    $region7: #{tpu_custom_call.1} parent=1 // pred_check_branch
      %24 = sbr.rel (0) target = $region9
    $region8: #{tpu_custom_call.1} parent=1 // pred_region
      _
    $region9: #{tpu_custom_call.1} parent=1 // pred_fallthru
      _
    // Predicated region
    $region10: #{tpu_custom_call.1} parent=1 // pred_check
      _
    $region11: #{tpu_custom_call.1} parent=1 // pred_check_branch
      %26 = sbr.rel (0) target = $region13
    $region12: #{tpu_custom_call.1} parent=1 // pred_region
      _
    $region13: #{tpu_custom_call.1} parent=1 // pred_fallthru
      _
    // Predicated region
    $region14: #{tpu_custom_call.1} parent=1 // pred_check
      _
    $region15: #{tpu_custom_call.1} parent=1 // pred_check_branch
      %28 = sbr.rel (0) target = $region17
    $region16: #{tpu_custom_call.1} parent=1 // pred_region
      _
    $region17: #{tpu_custom_call.1} parent=1 // pred_fallthru
      _
    // Predicated region
    $region18: #{tpu_custom_call.1} parent=1 // pred_check
      _
    $region19: #{tpu_custom_call.1} parent=1 // pred_check_branch
      %30 = sbr.rel (0) target = $region21
    $region20: #{tpu_custom_call.1} parent=1 // pred_region
      _
    $region21: #{tpu_custom_call.1} parent=1 // pred_fallthru
      _
    // Predicated region
    $region22: #{tpu_custom_call.1} parent=1 // pred_check
      _
    $region23: #{tpu_custom_call.1} parent=1 // pred_check_branch
      %32 = sbr.rel (0) target = $region25
    $region24: #{tpu_custom_call.1} parent=1 // pred_region
      _
    $region25: #{tpu_custom_call.1} parent=1 // pred_fallthru
      _
    // Predicated region
    $region26: #{tpu_custom_call.1} parent=1 // pred_check
      _
    $region27: #{tpu_custom_call.1} parent=1 // pred_check_branch
      %34 = sbr.rel (0) target = $region29
    $region28: #{tpu_custom_call.1} parent=1 // pred_region
      _
    $region29: #{tpu_custom_call.1} parent=1 // pred_fallthru
      _
    // Predicated region
    $region30: #{tpu_custom_call.1} parent=1 // pred_check
      _
    $region31: #{tpu_custom_call.1} parent=1 // pred_check_branch
      %36 = sbr.rel (0) target = $region33
    $region32: #{tpu_custom_call.1} parent=1 // pred_region
      _
    $region33: #{tpu_custom_call.1} parent=1 // pred_fallthru
      _
    // Predicated region
    $region34: #{tpu_custom_call.1} parent=1 // pred_check
      _
    $region35: #{tpu_custom_call.1} parent=1 // pred_check_branch
      %38 = sbr.rel (0) target = $region37
    $region36: #{tpu_custom_call.1} parent=1 // pred_region
      _
    $region37: #{tpu_custom_call.1} parent=1 // pred_fallthru
      _
    // Predicated region
    $region38: #{tpu_custom_call.1} parent=1 // pred_check
      _
    $region39: #{tpu_custom_call.1} parent=1 // pred_check_branch
      %40 = sbr.rel (0) target = $region41
    $region40: #{tpu_custom_call.1} parent=1 // pred_region
      _
    $region41: #{tpu_custom_call.1} parent=1 // pred_fallthru
      _
    // Predicated region
    $region42: #{tpu_custom_call.1} parent=1 // pred_check
      _
    $region43: #{tpu_custom_call.1} parent=1 // pred_check_branch
      %42 = sbr.rel (0) target = $region45
    $region44: #{tpu_custom_call.1} parent=1 // pred_region
      _
    $region45: #{tpu_custom_call.1} parent=1 // pred_fallthru
      _
    %v43 = vld [vmem:[%s2] sm:$0xff]
    %v44 = vld [vmem:[%s2 + $0x8] sm:$0xff]
    %v45 = vld [vmem:[%s2 + $0x10] sm:$0xff]
    %v46 = vld [vmem:[%s2 + $0x18] sm:$0xff]
    %v47 = vld [vmem:[%s0] sm:$0xff]
    %v49 = vcombine.high %v47, %v47
    %vm50 = vcmask 31744
    %v52 = vsel %vm50, %v43, 0
    %v55 = vsel %vm50, %v44, 0
    %v58 = vsel %vm50, %v45, 0
    %v61 = vsel %vm50, %v46, 0
    %vm63 = vcmask 1043456
    %v64 = vsel %vm63, %v47, 0
    %v66 = vsel %vm63, %v49, 0
    %68 = vmatprep.subr.mxu0 %v66
    %69 = vmatpush1.msra.mxu0 %v64
    %70 = vmatprep.subr.mxu0 0.0
    %71 = vmatpush1.msra.mxu0 0.0
    %72 = vmatprep.subr.mxu0 0.0
    %73 = vmatpush1.msra.mxu0 0.0
    %74 = vmatprep.subr.mxu0 0.0
    %75 = vmatpush1.msra.mxu0 0.0
    %76 = vmatprep.subr.mxu0 0.0
    %77 = vmatpush1.msra.mxu0 0.0
    %78 = vmatprep.subr.mxu0 0.0
    %79 = vmatpush1.msra.mxu0 0.0
    %80 = vmatprep.subr.mxu0 0.0
    %81 = vmatpush1.msra.mxu0 0.0
    %82 = vmatprep.subr.mxu0 0.0
    %83 = vmatpush1.msra.mxu0 0.0
    %84 = vmatprep.subr.mxu0 0.0
    %85 = vmatpush1.msra.mxu0 0.0
    %86 = vmatprep.subr.mxu0 0.0
    %87 = vmatpush1.msra.mxu0 0.0
    %88 = vmatprep.subr.mxu0 0.0
    %89 = vmatpush1.msra.mxu0 0.0
    %90 = vmatprep.subr.mxu0 0.0
    %91 = vmatpush1.msra.mxu0 0.0
    %92 = vmatprep.subr.mxu0 0.0
    %93 = vmatpush1.msra.mxu0 0.0
    %94 = vmatprep.subr.mxu0 0.0
    %95 = vmatpush1.msra.mxu0 0.0
    %96 = vmatprep.subr.mxu0 0.0
    %97 = vmatpush1.msra.mxu0 0.0
    %98 = vmatprep.subr.mxu0 0.0
    %99 = vmatpush1.msra.mxu0 0.0
    %100 = vmatprep.subr.mxu0 0.0
    %101 = vmatpush1.msra.mxu0 0.0
    %102 = vmatprep.subr.mxu0 0.0
    %103 = vmatpush1.msra.mxu0 0.0
    %104 = vmatprep.subr.mxu0 0.0
    %105 = vmatpush1.msra.mxu0 0.0
    %106 = vmatprep.subr.mxu0 0.0
    %107 = vmatpush1.msra.mxu0 0.0
    %108 = vmatprep.subr.mxu0 0.0
    %109 = vmatpush1.msra.mxu0 0.0
    %110 = vmatprep.subr.mxu0 0.0
    %111 = vmatpush1.msra.mxu0 0.0
    %112 = vmatprep.subr.mxu0 0.0
    %113 = vmatpush1.msra.mxu0 0.0
    %114 = vmatprep.subr.mxu0 0.0
    %115 = vmatpush1.msra.mxu0 0.0
    %116 = vmatprep.subr.mxu0 0.0
    %117 = vmatpush1.msra.mxu0 0.0
    %118 = vmatprep.subr.mxu0 0.0
    %119 = vmatpush1.msra.mxu0 0.0
    %120 = vmatprep.subr.mxu0 0.0
    %121 = vmatpush1.msra.mxu0 0.0
    %122 = vmatprep.subr.mxu0 0.0
    %123 = vmatpush1.msra.mxu0 0.0
    %124 = vmatprep.subr.mxu0 0.0
    %125 = vmatpush1.msra.mxu0 0.0
    %126 = vmatprep.subr.mxu0 0.0
    %127 = vmatpush1.msra.mxu0 0.0
    %128 = vmatprep.subr.mxu0 0.0
    %129 = vmatpush1.msra.mxu0 0.0
    %130 = vmatprep.subr.mxu0 0.0
    %131 = vmatpush1.msra.mxu0 0.0
    %132 = vmatprep.mubr.f32.mxu0 0.0
    %133 = vmatmul.mubr.f32.gmra.mrb[0].mxu0 %v52
    %v134 = vpop.f32.mrb[0].mxu0
    %v135 = vadd.f32 0.0, %v134
    %v136 = vpop.f32.mrb[0].mxu0
    %v137 = vadd.f32 0.0, %v136
    %138 = vmatprep.mubr.f32.mxu0 0.0
    %139 = vmatmul.mubr.f32.gmra.mrb[0].mxu0 %v55
    %v140 = vpop.f32.mrb[0].mxu0
    %v141 = vadd.f32 0.0, %v140
    %v142 = vpop.f32.mrb[0].mxu0
    %v143 = vadd.f32 0.0, %v142
    %144 = vmatprep.mubr.f32.mxu0 0.0
    %145 = vmatmul.mubr.f32.gmra.mrb[0].mxu0 %v58
    %v146 = vpop.f32.mrb[0].mxu0
    %v147 = vadd.f32 0.0, %v146
    %v148 = vpop.f32.mrb[0].mxu0
    %v149 = vadd.f32 0.0, %v148
    %150 = vmatprep.mubr.f32.mxu0 0.0
    %151 = vmatmul.mubr.f32.gmra.mrb[0].mxu0 %v61
    %v152 = vpop.f32.mrb[0].mxu0
    %v153 = vadd.f32 0.0, %v152
    %v154 = vpop.f32.mrb[0].mxu0
    %v155 = vadd.f32 0.0, %v154
    %156 = vdwg.mxu0
    %v157 = vld [vmem:[%s3] sm:$0xff]
    %v158 = vld [vmem:[%s3 + $0x8] sm:$0xff]
    %v159 = vld [vmem:[%s3 + $0x10] sm:$0xff]
    %v160 = vld [vmem:[%s3 + $0x18] sm:$0xff]
    %v161 = vld [vmem:[%s1] sm:$0xff]
    %v163 = vcombine.high %v161, %v161
    %v165 = vsel %vm50, %v157, 0
    %v168 = vsel %vm50, %v158, 0
    %v171 = vsel %vm50, %v159, 0
    %v174 = vsel %vm50, %v160, 0
    %v176 = vsel %vm63, %v161, 0
    %v178 = vsel %vm63, %v163, 0
    %180 = vmatprep.subr.mxu0 %v178
    %181 = vmatpush1.msra.mxu0 %v176
    %182 = vmatprep.subr.mxu0 0.0
    %183 = vmatpush1.msra.mxu0 0.0
    %184 = vmatprep.subr.mxu0 0.0
    %185 = vmatpush1.msra.mxu0 0.0
    %186 = vmatprep.subr.mxu0 0.0
    %187 = vmatpush1.msra.mxu0 0.0
    %188 = vmatprep.subr.mxu0 0.0
    %189 = vmatpush1.msra.mxu0 0.0
    %190 = vmatprep.subr.mxu0 0.0
    %191 = vmatpush1.msra.mxu0 0.0
    %192 = vmatprep.subr.mxu0 0.0
    %193 = vmatpush1.msra.mxu0 0.0
    %194 = vmatprep.subr.mxu0 0.0
    %195 = vmatpush1.msra.mxu0 0.0
    %196 = vmatprep.subr.mxu0 0.0
    %197 = vmatpush1.msra.mxu0 0.0
    %198 = vmatprep.subr.mxu0 0.0
    %199 = vmatpush1.msra.mxu0 0.0
    %200 = vmatprep.subr.mxu0 0.0
    %201 = vmatpush1.msra.mxu0 0.0
    %202 = vmatprep.subr.mxu0 0.0
    %203 = vmatpush1.msra.mxu0 0.0
    %204 = vmatprep.subr.mxu0 0.0
    %205 = vmatpush1.msra.mxu0 0.0
    %206 = vmatprep.subr.mxu0 0.0
    %207 = vmatpush1.msra.mxu0 0.0
    %208 = vmatprep.subr.mxu0 0.0
    %209 = vmatpush1.msra.mxu0 0.0
    %210 = vmatprep.subr.mxu0 0.0
    %211 = vmatpush1.msra.mxu0 0.0
    %212 = vmatprep.subr.mxu0 0.0
    %213 = vmatpush1.msra.mxu0 0.0
    %214 = vmatprep.subr.mxu0 0.0
    %215 = vmatpush1.msra.mxu0 0.0
    %216 = vmatprep.subr.mxu0 0.0
    %217 = vmatpush1.msra.mxu0 0.0
    %218 = vmatprep.subr.mxu0 0.0
    %219 = vmatpush1.msra.mxu0 0.0
    %220 = vmatprep.subr.mxu0 0.0
    %221 = vmatpush1.msra.mxu0 0.0
    %222 = vmatprep.subr.mxu0 0.0
    %223 = vmatpush1.msra.mxu0 0.0
    %224 = vmatprep.subr.mxu0 0.0
    %225 = vmatpush1.msra.mxu0 0.0
    %226 = vmatprep.subr.mxu0 0.0
    %227 = vmatpush1.msra.mxu0 0.0
    %228 = vmatprep.subr.mxu0 0.0
    %229 = vmatpush1.msra.mxu0 0.0
    %230 = vmatprep.subr.mxu0 0.0
    %231 = vmatpush1.msra.mxu0 0.0
    %232 = vmatprep.subr.mxu0 0.0
    %233 = vmatpush1.msra.mxu0 0.0
    %234 = vmatprep.subr.mxu0 0.0
    %235 = vmatpush1.msra.mxu0 0.0
    %236 = vmatprep.subr.mxu0 0.0
    %237 = vmatpush1.msra.mxu0 0.0
    %238 = vmatprep.subr.mxu0 0.0
    %239 = vmatpush1.msra.mxu0 0.0
    %240 = vmatprep.subr.mxu0 0.0
    %241 = vmatpush1.msra.mxu0 0.0
    %242 = vmatprep.subr.mxu0 0.0
    %243 = vmatpush1.msra.mxu0 0.0
    %244 = vmatprep.mubr.f32.mxu0 0.0
    %245 = vmatmul.mubr.f32.gmra.mrb[0].mxu0 %v165
    %v246 = vpop.f32.mrb[0].mxu0
    %v247 = vadd.f32 0.0, %v246
    %v248 = vpop.f32.mrb[0].mxu0
    %v249 = vadd.f32 0.0, %v248
    %250 = vmatprep.mubr.f32.mxu0 0.0
    %251 = vmatmul.mubr.f32.gmra.mrb[0].mxu0 %v168
    %v252 = vpop.f32.mrb[0].mxu0
    %v253 = vadd.f32 0.0, %v252
    %v254 = vpop.f32.mrb[0].mxu0
    %v255 = vadd.f32 0.0, %v254
    %256 = vmatprep.mubr.f32.mxu0 0.0
    %257 = vmatmul.mubr.f32.gmra.mrb[0].mxu0 %v171
    %v258 = vpop.f32.mrb[0].mxu0
    %v259 = vadd.f32 0.0, %v258
    %v260 = vpop.f32.mrb[0].mxu0
    %v261 = vadd.f32 0.0, %v260
    %262 = vmatprep.mubr.f32.mxu0 0.0
    %263 = vmatmul.mubr.f32.gmra.mrb[0].mxu0 %v174
    %v264 = vpop.f32.mrb[0].mxu0
    %v265 = vadd.f32 0.0, %v264
    %v266 = vpop.f32.mrb[0].mxu0
    %v267 = vadd.f32 0.0, %v266
    %268 = vdwg.mxu0
    %v269 = vadd.f32 %v135, %v137
    %270 = vadd.xlane.f32.xlu0 %v269
    %v271 = vpop.xlane.xlu0 %270
    %v272 = vadd.f32 %v141, %v143
    %273 = vadd.xlane.f32.xlu0 %v272
    %v274 = vpop.xlane.xlu0 %273
    %v275 = vadd.f32 %v147, %v149
    %276 = vadd.xlane.f32.xlu0 %v275
    %v277 = vpop.xlane.xlu0 %276
    %v278 = vadd.f32 %v153, %v155
    %279 = vadd.xlane.f32.xlu0 %v278
    %v280 = vpop.xlane.xlu0 %279
    %v281 = vadd.f32 %v271, 0.0
    %v282 = vadd.f32 %v274, 0.0
    %v283 = vadd.f32 %v277, 0.0
    %v284 = vadd.f32 %v280, 0.0
    %v285 = vmul.f32 %v135, %v135
    %v286 = vmul.f32 %v137, %v137
    %v287 = vmul.f32 %v141, %v141
    %v288 = vmul.f32 %v143, %v143
    %v289 = vmul.f32 %v147, %v147
    %v290 = vmul.f32 %v149, %v149
    %v291 = vmul.f32 %v153, %v153
    %v292 = vmul.f32 %v155, %v155
    %v293 = vadd.f32 %v285, %v286
    %294 = vadd.xlane.f32.xlu0 %v293
    %v295 = vpop.xlane.xlu0 %294
    %v296 = vadd.f32 %v287, %v288
    %297 = vadd.xlane.f32.xlu0 %v296
    %v298 = vpop.xlane.xlu0 %297
    %v299 = vadd.f32 %v289, %v290
    %300 = vadd.xlane.f32.xlu0 %v299
    %v301 = vpop.xlane.xlu0 %300
    %v302 = vadd.f32 %v291, %v292
    %303 = vadd.xlane.f32.xlu0 %v302
    %v304 = vpop.xlane.xlu0 %303
    %v305 = vadd.f32 %v295, 0.0
    %v306 = vadd.f32 %v298, 0.0
    %v307 = vadd.f32 %v301, 0.0
    %v308 = vadd.f32 %v304, 0.0
    %v309 = vadd.f32 %v247, %v249
    %310 = vadd.xlane.f32.xlu0 %v309
    %v311 = vpop.xlane.xlu0 %310
    %v312 = vadd.f32 %v253, %v255
    %313 = vadd.xlane.f32.xlu0 %v312
    %v314 = vpop.xlane.xlu0 %313
    %v315 = vadd.f32 %v259, %v261
    %316 = vadd.xlane.f32.xlu0 %v315
    %v317 = vpop.xlane.xlu0 %316
    %v318 = vadd.f32 %v265, %v267
    %319 = vadd.xlane.f32.xlu0 %v318
    %v320 = vpop.xlane.xlu0 %319
    %v321 = vadd.f32 %v311, 0.0
    %v322 = vadd.f32 %v314, 0.0
    %v323 = vadd.f32 %v317, 0.0
    %v324 = vadd.f32 %v320, 0.0
    %v325 = vmul.f32 %v247, %v247
    %v326 = vmul.f32 %v249, %v249
    %v327 = vmul.f32 %v253, %v253
    %v328 = vmul.f32 %v255, %v255
    %v329 = vmul.f32 %v259, %v259
    %v330 = vmul.f32 %v261, %v261
    %v331 = vmul.f32 %v265, %v265
    %v332 = vmul.f32 %v267, %v267
    %v333 = vadd.f32 %v325, %v326
    %334 = vadd.xlane.f32.xlu0 %v333
    %v335 = vpop.xlane.xlu0 %334
    %v336 = vadd.f32 %v327, %v328
    %337 = vadd.xlane.f32.xlu0 %v336
    %v338 = vpop.xlane.xlu0 %337
    %v339 = vadd.f32 %v329, %v330
    %340 = vadd.xlane.f32.xlu0 %v339
    %v341 = vpop.xlane.xlu0 %340
    %v342 = vadd.f32 %v331, %v332
    %343 = vadd.xlane.f32.xlu0 %v342
    %v344 = vpop.xlane.xlu0 %343
    %v345 = vadd.f32 %v335, 0.0
    %v346 = vadd.f32 %v338, 0.0
    %v347 = vadd.f32 %v341, 0.0
    %v348 = vadd.f32 %v344, 0.0
    %s349 = scalar_lea.vmem %s0, 8
    %v350 = vld [vmem:[%s349] sm:$0xff]
    %v352 = vcombine.high %v350, %v350
    %v353 = vsel %vm63, %v350, 0
    %v355 = vsel %vm63, %v352, 0
    %357 = vmatprep.subr.mxu0 %v355
    %358 = vmatpush1.msra.mxu0 %v353
    %359 = vmatprep.subr.mxu0 0.0
    %360 = vmatpush1.msra.mxu0 0.0
    %361 = vmatprep.subr.mxu0 0.0
    %362 = vmatpush1.msra.mxu0 0.0
    %363 = vmatprep.subr.mxu0 0.0
    %364 = vmatpush1.msra.mxu0 0.0
    %365 = vmatprep.subr.mxu0 0.0
    %366 = vmatpush1.msra.mxu0 0.0
    %367 = vmatprep.subr.mxu0 0.0
    %368 = vmatpush1.msra.mxu0 0.0
    %369 = vmatprep.subr.mxu0 0.0
    %370 = vmatpush1.msra.mxu0 0.0
    %371 = vmatprep.subr.mxu0 0.0
    %372 = vmatpush1.msra.mxu0 0.0
    %373 = vmatprep.subr.mxu0 0.0
    %374 = vmatpush1.msra.mxu0 0.0
    %375 = vmatprep.subr.mxu0 0.0
    %376 = vmatpush1.msra.mxu0 0.0
    %377 = vmatprep.subr.mxu0 0.0
    %378 = vmatpush1.msra.mxu0 0.0
    %379 = vmatprep.subr.mxu0 0.0
    %380 = vmatpush1.msra.mxu0 0.0
    %381 = vmatprep.subr.mxu0 0.0
    %382 = vmatpush1.msra.mxu0 0.0
    %383 = vmatprep.subr.mxu0 0.0
    %384 = vmatpush1.msra.mxu0 0.0
    %385 = vmatprep.subr.mxu0 0.0
    %386 = vmatpush1.msra.mxu0 0.0
    %387 = vmatprep.subr.mxu0 0.0
    %388 = vmatpush1.msra.mxu0 0.0
    %389 = vmatprep.subr.mxu0 0.0
    %390 = vmatpush1.msra.mxu0 0.0
    %391 = vmatprep.subr.mxu0 0.0
    %392 = vmatpush1.msra.mxu0 0.0
    %393 = vmatprep.subr.mxu0 0.0
    %394 = vmatpush1.msra.mxu0 0.0
    %395 = vmatprep.subr.mxu0 0.0
    %396 = vmatpush1.msra.mxu0 0.0
    %397 = vmatprep.subr.mxu0 0.0
    %398 = vmatpush1.msra.mxu0 0.0
    %399 = vmatprep.subr.mxu0 0.0
    %400 = vmatpush1.msra.mxu0 0.0
    %401 = vmatprep.subr.mxu0 0.0
    %402 = vmatpush1.msra.mxu0 0.0
    %403 = vmatprep.subr.mxu0 0.0
    %404 = vmatpush1.msra.mxu0 0.0
    %405 = vmatprep.subr.mxu0 0.0
    %406 = vmatpush1.msra.mxu0 0.0
    %407 = vmatprep.subr.mxu0 0.0
    %408 = vmatpush1.msra.mxu0 0.0
    %409 = vmatprep.subr.mxu0 0.0
    %410 = vmatpush1.msra.mxu0 0.0
    %411 = vmatprep.subr.mxu0 0.0
    %412 = vmatpush1.msra.mxu0 0.0
    %413 = vmatprep.subr.mxu0 0.0
    %414 = vmatpush1.msra.mxu0 0.0
    %415 = vmatprep.subr.mxu0 0.0
    %416 = vmatpush1.msra.mxu0 0.0
    %417 = vmatprep.subr.mxu0 0.0
    %418 = vmatpush1.msra.mxu0 0.0
    %419 = vmatprep.subr.mxu0 0.0
    %420 = vmatpush1.msra.mxu0 0.0
    %421 = vmatprep.mubr.f32.mxu0 0.0
    %422 = vmatmul.mubr.f32.gmra.mrb[0].mxu0 %v52
    %v423 = vpop.f32.mrb[0].mxu0
    %v424 = vadd.f32 0.0, %v423
    %v425 = vpop.f32.mrb[0].mxu0
    %v426 = vadd.f32 0.0, %v425
    %427 = vmatprep.mubr.f32.mxu0 0.0
    %428 = vmatmul.mubr.f32.gmra.mrb[0].mxu0 %v55
    %v429 = vpop.f32.mrb[0].mxu0
    %v430 = vadd.f32 0.0, %v429
    %v431 = vpop.f32.mrb[0].mxu0
    %v432 = vadd.f32 0.0, %v431
    %433 = vmatprep.mubr.f32.mxu0 0.0
    %434 = vmatmul.mubr.f32.gmra.mrb[0].mxu0 %v58
    %v435 = vpop.f32.mrb[0].mxu0
    %v436 = vadd.f32 0.0, %v435
    %v437 = vpop.f32.mrb[0].mxu0
    %v438 = vadd.f32 0.0, %v437
    %439 = vmatprep.mubr.f32.mxu0 0.0
    %440 = vmatmul.mubr.f32.gmra.mrb[0].mxu0 %v61
    %v441 = vpop.f32.mrb[0].mxu0
    %v442 = vadd.f32 0.0, %v441
    %v443 = vpop.f32.mrb[0].mxu0
    %v444 = vadd.f32 0.0, %v443
    %445 = vdwg.mxu0
    %s446 = scalar_lea.vmem %s1, 8
    %v447 = vld [vmem:[%s446] sm:$0xff]
    %v449 = vcombine.high %v447, %v447
    %v450 = vsel %vm63, %v447, 0
    %v452 = vsel %vm63, %v449, 0
    %454 = vmatprep.subr.mxu0 %v452
    %455 = vmatpush1.msra.mxu0 %v450
    %456 = vmatprep.subr.mxu0 0.0
    %457 = vmatpush1.msra.mxu0 0.0
    %458 = vmatprep.subr.mxu0 0.0
    %459 = vmatpush1.msra.mxu0 0.0
    %460 = vmatprep.subr.mxu0 0.0
    %461 = vmatpush1.msra.mxu0 0.0
    %462 = vmatprep.subr.mxu0 0.0
    %463 = vmatpush1.msra.mxu0 0.0
    %464 = vmatprep.subr.mxu0 0.0
    %465 = vmatpush1.msra.mxu0 0.0
    %466 = vmatprep.subr.mxu0 0.0
    %467 = vmatpush1.msra.mxu0 0.0
    %468 = vmatprep.subr.mxu0 0.0
    %469 = vmatpush1.msra.mxu0 0.0
    %470 = vmatprep.subr.mxu0 0.0
    %471 = vmatpush1.msra.mxu0 0.0
    %472 = vmatprep.subr.mxu0 0.0
    %473 = vmatpush1.msra.mxu0 0.0
    %474 = vmatprep.subr.mxu0 0.0
    %475 = vmatpush1.msra.mxu0 0.0
    %476 = vmatprep.subr.mxu0 0.0
    %477 = vmatpush1.msra.mxu0 0.0
    %478 = vmatprep.subr.mxu0 0.0
    %479 = vmatpush1.msra.mxu0 0.0
    %480 = vmatprep.subr.mxu0 0.0
    %481 = vmatpush1.msra.mxu0 0.0
    %482 = vmatprep.subr.mxu0 0.0
    %483 = vmatpush1.msra.mxu0 0.0
    %484 = vmatprep.subr.mxu0 0.0
    %485 = vmatpush1.msra.mxu0 0.0
    %486 = vmatprep.subr.mxu0 0.0
    %487 = vmatpush1.msra.mxu0 0.0
    %488 = vmatprep.subr.mxu0 0.0
    %489 = vmatpush1.msra.mxu0 0.0
    %490 = vmatprep.subr.mxu0 0.0
    %491 = vmatpush1.msra.mxu0 0.0
    %492 = vmatprep.subr.mxu0 0.0
    %493 = vmatpush1.msra.mxu0 0.0
    %494 = vmatprep.subr.mxu0 0.0
    %495 = vmatpush1.msra.mxu0 0.0
    %496 = vmatprep.subr.mxu0 0.0
    %497 = vmatpush1.msra.mxu0 0.0
    %498 = vmatprep.subr.mxu0 0.0
    %499 = vmatpush1.msra.mxu0 0.0
    %500 = vmatprep.subr.mxu0 0.0
    %501 = vmatpush1.msra.mxu0 0.0
    %502 = vmatprep.subr.mxu0 0.0
    %503 = vmatpush1.msra.mxu0 0.0
    %504 = vmatprep.subr.mxu0 0.0
    %505 = vmatpush1.msra.mxu0 0.0
    %506 = vmatprep.subr.mxu0 0.0
    %507 = vmatpush1.msra.mxu0 0.0
    %508 = vmatprep.subr.mxu0 0.0
    %509 = vmatpush1.msra.mxu0 0.0
    %510 = vmatprep.subr.mxu0 0.0
    %511 = vmatpush1.msra.mxu0 0.0
    %512 = vmatprep.subr.mxu0 0.0
    %513 = vmatpush1.msra.mxu0 0.0
    %514 = vmatprep.subr.mxu0 0.0
    %515 = vmatpush1.msra.mxu0 0.0
    %516 = vmatprep.subr.mxu0 0.0
    %517 = vmatpush1.msra.mxu0 0.0
    %518 = vmatprep.mubr.f32.mxu0 0.0
    %519 = vmatmul.mubr.f32.gmra.mrb[0].mxu0 %v165
    %v520 = vpop.f32.mrb[0].mxu0
    %v521 = vadd.f32 0.0, %v520
    %v522 = vpop.f32.mrb[0].mxu0
    %v523 = vadd.f32 0.0, %v522
    %524 = vmatprep.mubr.f32.mxu0 0.0
    %525 = vmatmul.mubr.f32.gmra.mrb[0].mxu0 %v168
    %v526 = vpop.f32.mrb[0].mxu0
    %v527 = vadd.f32 0.0, %v526
    %v528 = vpop.f32.mrb[0].mxu0
    %v529 = vadd.f32 0.0, %v528
    %530 = vmatprep.mubr.f32.mxu0 0.0
    %531 = vmatmul.mubr.f32.gmra.mrb[0].mxu0 %v171
    %v532 = vpop.f32.mrb[0].mxu0
    %v533 = vadd.f32 0.0, %v532
    %v534 = vpop.f32.mrb[0].mxu0
    %v535 = vadd.f32 0.0, %v534
    %536 = vmatprep.mubr.f32.mxu0 0.0
    %537 = vmatmul.mubr.f32.gmra.mrb[0].mxu0 %v174
    %v538 = vpop.f32.mrb[0].mxu0
    %v539 = vadd.f32 0.0, %v538
    %v540 = vpop.f32.mrb[0].mxu0
    %v541 = vadd.f32 0.0, %v540
    %542 = vdwg.mxu0
    %v543 = vadd.f32 %v424, %v426
    %544 = vadd.xlane.f32.xlu0 %v543
    %v545 = vpop.xlane.xlu0 %544
    %v546 = vadd.f32 %v430, %v432
    %547 = vadd.xlane.f32.xlu0 %v546
    %v548 = vpop.xlane.xlu0 %547
    %v549 = vadd.f32 %v436, %v438
    %550 = vadd.xlane.f32.xlu0 %v549
    %v551 = vpop.xlane.xlu0 %550
    %v552 = vadd.f32 %v442, %v444
    %553 = vadd.xlane.f32.xlu0 %v552
    %v554 = vpop.xlane.xlu0 %553
    %v555 = vadd.f32 %v281, %v545
    %v556 = vadd.f32 %v282, %v548
    %v557 = vadd.f32 %v283, %v551
    %v558 = vadd.f32 %v284, %v554
    %v559 = vmul.f32 %v424, %v424
    %v560 = vmul.f32 %v426, %v426
    %v561 = vmul.f32 %v430, %v430
    %v562 = vmul.f32 %v432, %v432
    %v563 = vmul.f32 %v436, %v436
    %v564 = vmul.f32 %v438, %v438
    %v565 = vmul.f32 %v442, %v442
    %v566 = vmul.f32 %v444, %v444
    %v567 = vadd.f32 %v559, %v560
    %568 = vadd.xlane.f32.xlu0 %v567
    %v569 = vpop.xlane.xlu0 %568
    %v570 = vadd.f32 %v561, %v562
    %571 = vadd.xlane.f32.xlu0 %v570
    %v572 = vpop.xlane.xlu0 %571
    %v573 = vadd.f32 %v563, %v564
    %574 = vadd.xlane.f32.xlu0 %v573
    %v575 = vpop.xlane.xlu0 %574
    %v576 = vadd.f32 %v565, %v566
    %577 = vadd.xlane.f32.xlu0 %v576
    %v578 = vpop.xlane.xlu0 %577
    %v579 = vadd.f32 %v305, %v569
    %v580 = vadd.f32 %v306, %v572
    %v581 = vadd.f32 %v307, %v575
    %v582 = vadd.f32 %v308, %v578
    %v583 = vadd.f32 %v521, %v523
    %584 = vadd.xlane.f32.xlu0 %v583
    %v585 = vpop.xlane.xlu0 %584
    %v586 = vadd.f32 %v527, %v529
    %587 = vadd.xlane.f32.xlu0 %v586
    %v588 = vpop.xlane.xlu0 %587
    %v589 = vadd.f32 %v533, %v535
    %590 = vadd.xlane.f32.xlu0 %v589
    %v591 = vpop.xlane.xlu0 %590
    %v592 = vadd.f32 %v539, %v541
    %593 = vadd.xlane.f32.xlu0 %v592
    %v594 = vpop.xlane.xlu0 %593
    %v595 = vadd.f32 %v321, %v585
    %v596 = vadd.f32 %v322, %v588
    %v597 = vadd.f32 %v323, %v591
    %v598 = vadd.f32 %v324, %v594
    %v599 = vmul.f32 %v521, %v521
    %v600 = vmul.f32 %v523, %v523
    %v601 = vmul.f32 %v527, %v527
    %v602 = vmul.f32 %v529, %v529
    %v603 = vmul.f32 %v533, %v533
    %v604 = vmul.f32 %v535, %v535
    %v605 = vmul.f32 %v539, %v539
    %v606 = vmul.f32 %v541, %v541
    %v607 = vadd.f32 %v599, %v600
    %608 = vadd.xlane.f32.xlu0 %v607
    %v609 = vpop.xlane.xlu0 %608
    %v610 = vadd.f32 %v601, %v602
    %611 = vadd.xlane.f32.xlu0 %v610
    %v612 = vpop.xlane.xlu0 %611
    %v613 = vadd.f32 %v603, %v604
    %614 = vadd.xlane.f32.xlu0 %v613
    %v615 = vpop.xlane.xlu0 %614
    %v616 = vadd.f32 %v605, %v606
    %617 = vadd.xlane.f32.xlu0 %v616
    %v618 = vpop.xlane.xlu0 %617
    %v619 = vadd.f32 %v345, %v609
    %v620 = vadd.f32 %v346, %v612
    %v621 = vadd.f32 %v347, %v615
    %v622 = vadd.f32 %v348, %v618
    %v623 = vmul.f32 %v555, 0.001953125
    %v624 = vmul.f32 %v556, 0.001953125
    %v625 = vmul.f32 %v557, 0.001953125
    %v626 = vmul.f32 %v558, 0.001953125
    %v627 = vmul.f32 %v579, 0.001953125
    %v628 = vmul.f32 %v580, 0.001953125
    %v629 = vmul.f32 %v581, 0.001953125
    %v630 = vmul.f32 %v582, 0.001953125
    %v631 = vmul.f32 %v623, %v623
    %v632 = vmul.f32 %v624, %v624
    %v633 = vmul.f32 %v625, %v625
    %v634 = vmul.f32 %v626, %v626
    %v635 = vsub.f32 %v627, %v631
    %v636 = vsub.f32 %v628, %v632
    %v637 = vsub.f32 %v629, %v633
    %v638 = vsub.f32 %v630, %v634
    %v639 = vld [vmem:[%s5] sm:$0xff]
    %v640 = vld [vmem:[%s5 + $0x8] sm:$0xff]
    %v641 = vld [vmem:[%s5 + $0x10] sm:$0xff]
    %v642 = vld [vmem:[%s5 + $0x18] sm:$0xff]
    %v643 = vadd.f32 %v635, 1e-05
    %v644 = vadd.f32 %v636, 1e-05
    %v645 = vadd.f32 %v637, 1e-05
    %v646 = vadd.f32 %v638, 1e-05
    %v647 = vrsqrt.pop %v643
    %v648 = vrsqrt.pop %v644
    %v649 = vrsqrt.pop %v645
    %v650 = vrsqrt.pop %v646
    %v651 = vmul.f32 %v639, %v647
    %v652 = vmul.f32 %v640, %v648
    %v653 = vmul.f32 %v641, %v649
    %v654 = vmul.f32 %v642, %v650
    %v655 = vld [vmem:[%s6] sm:$0xff]
    %v656 = vld [vmem:[%s6 + $0x8] sm:$0xff]
    %v657 = vld [vmem:[%s6 + $0x10] sm:$0xff]
    %v658 = vld [vmem:[%s6 + $0x18] sm:$0xff]
    %v659 = vmul.f32 %v623, %v651
    %v660 = vmul.f32 %v624, %v652
    %v661 = vmul.f32 %v625, %v653
    %v662 = vmul.f32 %v626, %v654
    %v663 = vsub.f32 %v655, %v659
    %v664 = vsub.f32 %v656, %v660
    %v665 = vsub.f32 %v657, %v661
    %v666 = vsub.f32 %v658, %v662
    %v667 = vmul.f32 %v595, 0.001953125
    %v668 = vmul.f32 %v596, 0.001953125
    %v669 = vmul.f32 %v597, 0.001953125
    %v670 = vmul.f32 %v598, 0.001953125
    %v671 = vmul.f32 %v619, 0.001953125
    %v672 = vmul.f32 %v620, 0.001953125
    %v673 = vmul.f32 %v621, 0.001953125
    %v674 = vmul.f32 %v622, 0.001953125
    %v675 = vmul.f32 %v667, %v667
    %v676 = vmul.f32 %v668, %v668
    %v677 = vmul.f32 %v669, %v669
    %v678 = vmul.f32 %v670, %v670
    %v679 = vsub.f32 %v671, %v675
    %v680 = vsub.f32 %v672, %v676
    %v681 = vsub.f32 %v673, %v677
    %v682 = vsub.f32 %v674, %v678
    %v683 = vld [vmem:[%s7] sm:$0xff]
    %v684 = vld [vmem:[%s7 + $0x8] sm:$0xff]
    %v685 = vld [vmem:[%s7 + $0x10] sm:$0xff]
    %v686 = vld [vmem:[%s7 + $0x18] sm:$0xff]
    %v687 = vadd.f32 %v679, 1e-05
    %v688 = vadd.f32 %v680, 1e-05
    %v689 = vadd.f32 %v681, 1e-05
    %v690 = vadd.f32 %v682, 1e-05
    %v691 = vrsqrt.pop %v687
    %v692 = vrsqrt.pop %v688
    %v693 = vrsqrt.pop %v689
    %v694 = vrsqrt.pop %v690
    %v695 = vmul.f32 %v683, %v691
    %v696 = vmul.f32 %v684, %v692
    %v697 = vmul.f32 %v685, %v693
    %v698 = vmul.f32 %v686, %v694
    %v699 = vld [vmem:[%s8] sm:$0xff]
    %v700 = vld [vmem:[%s8 + $0x8] sm:$0xff]
    %v701 = vld [vmem:[%s8 + $0x10] sm:$0xff]
    %v702 = vld [vmem:[%s8 + $0x18] sm:$0xff]
    %v703 = vmul.f32 %v667, %v695
    %v704 = vmul.f32 %v668, %v696
    %v705 = vmul.f32 %v669, %v697
    %v706 = vmul.f32 %v670, %v698
    %v707 = vsub.f32 %v699, %v703
    %v708 = vsub.f32 %v700, %v704
    %v709 = vsub.f32 %v701, %v705
    %v710 = vsub.f32 %v702, %v706
    %712 = vset.pattern.permute.xlu0 0
    %713 = vperm.xlu0 %712, %v651
    %v714 = vpop.permute.xlu0 %713
    %717 = vset.pattern.permute.xlu0 0
    %718 = vperm.xlu0 %717, %v652
    %v719 = vpop.permute.xlu0 %718
    %722 = vset.pattern.permute.xlu0 0
    %723 = vperm.xlu0 %722, %v653
    %v724 = vpop.permute.xlu0 %723
    %727 = vset.pattern.permute.xlu0 0
    %728 = vperm.xlu0 %727, %v654
    %v729 = vpop.permute.xlu0 %728
    %v731 = vmul.f32 %v135, %v714
    %v732 = vmul.f32 %v137, %v714
    %v733 = vmul.f32 %v141, %v719
    %v734 = vmul.f32 %v143, %v719
    %v735 = vmul.f32 %v147, %v724
    %v736 = vmul.f32 %v149, %v724
    %v737 = vmul.f32 %v153, %v729
    %v738 = vmul.f32 %v155, %v729
    %740 = vset.pattern.permute.xlu0 0
    %741 = vperm.xlu0 %740, %v663
    %v742 = vpop.permute.xlu0 %741
    %745 = vset.pattern.permute.xlu0 0
    %746 = vperm.xlu0 %745, %v664
    %v747 = vpop.permute.xlu0 %746
    %750 = vset.pattern.permute.xlu0 0
    %751 = vperm.xlu0 %750, %v665
    %v752 = vpop.permute.xlu0 %751
    %755 = vset.pattern.permute.xlu0 0
    %756 = vperm.xlu0 %755, %v666
    %v757 = vpop.permute.xlu0 %756
    %v759 = vadd.f32 %v731, %v742
    %v760 = vadd.f32 %v732, %v742
    %v761 = vadd.f32 %v733, %v747
    %v762 = vadd.f32 %v734, %v747
    %v763 = vadd.f32 %v735, %v752
    %v764 = vadd.f32 %v736, %v752
    %v765 = vadd.f32 %v737, %v757
    %v766 = vadd.f32 %v738, %v757
    %768 = vset.pattern.permute.xlu0 0
    %769 = vperm.xlu0 %768, %v695
    %v770 = vpop.permute.xlu0 %769
    %773 = vset.pattern.permute.xlu0 0
    %774 = vperm.xlu0 %773, %v696
    %v775 = vpop.permute.xlu0 %774
    %778 = vset.pattern.permute.xlu0 0
    %779 = vperm.xlu0 %778, %v697
    %v780 = vpop.permute.xlu0 %779
    %783 = vset.pattern.permute.xlu0 0
    %784 = vperm.xlu0 %783, %v698
    %v785 = vpop.permute.xlu0 %784
    %v787 = vmul.f32 %v247, %v770
    %v788 = vmul.f32 %v249, %v770
    %v789 = vmul.f32 %v253, %v775
    %v790 = vmul.f32 %v255, %v775
    %v791 = vmul.f32 %v259, %v780
    %v792 = vmul.f32 %v261, %v780
    %v793 = vmul.f32 %v265, %v785
    %v794 = vmul.f32 %v267, %v785
    %v795 = vadd.f32 %v759, %v787
    %v796 = vadd.f32 %v760, %v788
    %v797 = vadd.f32 %v761, %v789
    %v798 = vadd.f32 %v762, %v790
    %v799 = vadd.f32 %v763, %v791
    %v800 = vadd.f32 %v764, %v792
    %v801 = vadd.f32 %v765, %v793
    %v802 = vadd.f32 %v766, %v794
    %804 = vset.pattern.permute.xlu0 0
    %805 = vperm.xlu0 %804, %v707
    %v806 = vpop.permute.xlu0 %805
    %809 = vset.pattern.permute.xlu0 0
    %810 = vperm.xlu0 %809, %v708
    %v811 = vpop.permute.xlu0 %810
    %814 = vset.pattern.permute.xlu0 0
    %815 = vperm.xlu0 %814, %v709
    %v816 = vpop.permute.xlu0 %815
    %819 = vset.pattern.permute.xlu0 0
    %820 = vperm.xlu0 %819, %v710
    %v821 = vpop.permute.xlu0 %820
    %v823 = vadd.f32 %v795, %v806
    %v824 = vadd.f32 %v796, %v806
    %v825 = vadd.f32 %v797, %v811
    %v826 = vadd.f32 %v798, %v811
    %v827 = vadd.f32 %v799, %v816
    %v828 = vadd.f32 %v800, %v816
    %v829 = vadd.f32 %v801, %v821
    %v830 = vadd.f32 %v802, %v821
    %v831 = vmax.f32 %v823, 0.0
    %v832 = vmax.f32 %v824, 0.0
    %v833 = vmax.f32 %v825, 0.0
    %v834 = vmax.f32 %v826, 0.0
    %v835 = vmax.f32 %v827, 0.0
    %v836 = vmax.f32 %v828, 0.0
    %v837 = vmax.f32 %v829, 0.0
    %v838 = vmax.f32 %v830, 0.0
    %v839 = vld [vmem:[%s4] sm:$0xff]
    %v840 = vld [vmem:[%s4 + $0x8] sm:$0xff]
    %v841 = vld [vmem:[%s4 + $0x10] sm:$0xff]
    %v842 = vld [vmem:[%s4 + $0x18] sm:$0xff]
    %844 = vset.pattern.permute.xlu0 0
    %845 = vperm.xlu0 %844, %v839
    %v846 = vpop.permute.xlu0 %845
    %849 = vset.pattern.permute.xlu0 0
    %850 = vperm.xlu0 %849, %v840
    %v851 = vpop.permute.xlu0 %850
    %854 = vset.pattern.permute.xlu0 0
    %855 = vperm.xlu0 %854, %v841
    %v856 = vpop.permute.xlu0 %855
    %859 = vset.pattern.permute.xlu0 0
    %860 = vperm.xlu0 %859, %v842
    %v861 = vpop.permute.xlu0 %860
    %v863 = vmul.f32 %v831, %v846
    %v864 = vmul.f32 %v832, %v846
    %v865 = vmul.f32 %v833, %v851
    %v866 = vmul.f32 %v834, %v851
    %v867 = vmul.f32 %v835, %v856
    %v868 = vmul.f32 %v836, %v856
    %v869 = vmul.f32 %v837, %v861
    %v870 = vmul.f32 %v838, %v861
    %v871 = vadd.f32 %v863, %v865
    %v872 = vadd.f32 %v871, %v867
    %v873 = vadd.f32 %v872, %v869
    %v874 = vrot.slane %v873, 4
    %v875 = vadd.f32 %v873, %v874
    %v876 = vrot.slane %v875, 2
    %v877 = vadd.f32 %v875, %v876
    %v878 = vrot.slane %v877, 1
    %v879 = vadd.f32 %v877, %v878
    %v880 = vadd.f32 %v864, %v866
    %v881 = vadd.f32 %v880, %v868
    %v882 = vadd.f32 %v881, %v870
    %v883 = vrot.slane %v882, 4
    %v884 = vadd.f32 %v882, %v883
    %v885 = vrot.slane %v884, 2
    %v886 = vadd.f32 %v884, %v885
    %v887 = vrot.slane %v886, 1
    %v888 = vadd.f32 %v886, %v887
    %vm889 = vcmask 1040384
    %v890 = vsel %vm889, %v879, 0.0
    %v891 = vsel %vm889, %v888, 0.0
    %v892 = vadd.f32 %v890, %v891
    %893 = vadd.xlane.f32.xlu0 %v892
    %v894 = vpop.xlane.xlu0 %893
    %v895 = vrot.slane %v894, 4
    %v896 = vadd.f32 %v894, %v895
    %v897 = vrot.slane %v896, 2
    %v898 = vadd.f32 %v896, %v897
    %v899 = vrot.slane %v898, 1
    %v900 = vadd.f32 %v898, %v899
    %s901 = vtos %v900
    %v902 = vstv %s901
    %v903 = vadd.f32 %v902, 0.0
    %v904 = vmul.f32 %v879, %v879
    %v905 = vmul.f32 %v888, %v888
    %v906 = vsel %vm889, %v904, 0.0
    %v907 = vsel %vm889, %v905, 0.0
    %v908 = vadd.f32 %v906, %v907
    %909 = vadd.xlane.f32.xlu0 %v908
    %v910 = vpop.xlane.xlu0 %909
    %v911 = vrot.slane %v910, 4
    %v912 = vadd.f32 %v910, %v911
    %v913 = vrot.slane %v912, 2
    %v914 = vadd.f32 %v912, %v913
    %v915 = vrot.slane %v914, 1
    %v916 = vadd.f32 %v914, %v915
    %s917 = vtos %v916
    %v918 = vstv %s917
    %v919 = vadd.f32 %v918, 0.0
    %v920 = vmul.f32 %v424, %v714
    %v921 = vmul.f32 %v426, %v714
    %v922 = vmul.f32 %v430, %v719
    %v923 = vmul.f32 %v432, %v719
    %v924 = vmul.f32 %v436, %v724
    %v925 = vmul.f32 %v438, %v724
    %v926 = vmul.f32 %v442, %v729
    %v927 = vmul.f32 %v444, %v729
    %v928 = vadd.f32 %v920, %v742
    %v929 = vadd.f32 %v921, %v742
    %v930 = vadd.f32 %v922, %v747
    %v931 = vadd.f32 %v923, %v747
    %v932 = vadd.f32 %v924, %v752
    %v933 = vadd.f32 %v925, %v752
    %v934 = vadd.f32 %v926, %v757
    %v935 = vadd.f32 %v927, %v757
    %v936 = vmul.f32 %v521, %v770
    %v937 = vmul.f32 %v523, %v770
    %v938 = vmul.f32 %v527, %v775
    %v939 = vmul.f32 %v529, %v775
    %v940 = vmul.f32 %v533, %v780
    %v941 = vmul.f32 %v535, %v780
    %v942 = vmul.f32 %v539, %v785
    %v943 = vmul.f32 %v541, %v785
    %v944 = vadd.f32 %v928, %v936
    %v945 = vadd.f32 %v929, %v937
    %v946 = vadd.f32 %v930, %v938
    %v947 = vadd.f32 %v931, %v939
    %v948 = vadd.f32 %v932, %v940
    %v949 = vadd.f32 %v933, %v941
    %v950 = vadd.f32 %v934, %v942
    %v951 = vadd.f32 %v935, %v943
    %v952 = vadd.f32 %v944, %v806
    %v953 = vadd.f32 %v945, %v806
    %v954 = vadd.f32 %v946, %v811
    %v955 = vadd.f32 %v947, %v811
    %v956 = vadd.f32 %v948, %v816
    %v957 = vadd.f32 %v949, %v816
    %v958 = vadd.f32 %v950, %v821
    %v959 = vadd.f32 %v951, %v821
    %v960 = vmax.f32 %v952, 0.0
    %v961 = vmax.f32 %v953, 0.0
    %v962 = vmax.f32 %v954, 0.0
    %v963 = vmax.f32 %v955, 0.0
    %v964 = vmax.f32 %v956, 0.0
    %v965 = vmax.f32 %v957, 0.0
    %v966 = vmax.f32 %v958, 0.0
    %v967 = vmax.f32 %v959, 0.0
    %v968 = vmul.f32 %v960, %v846
    %v969 = vmul.f32 %v961, %v846
    %v970 = vmul.f32 %v962, %v851
    %v971 = vmul.f32 %v963, %v851
    %v972 = vmul.f32 %v964, %v856
    %v973 = vmul.f32 %v965, %v856
    %v974 = vmul.f32 %v966, %v861
    %v975 = vmul.f32 %v967, %v861
    %v976 = vadd.f32 %v968, %v970
    %v977 = vadd.f32 %v976, %v972
    %v978 = vadd.f32 %v977, %v974
    %v979 = vrot.slane %v978, 4
    %v980 = vadd.f32 %v978, %v979
    %v981 = vrot.slane %v980, 2
    %v982 = vadd.f32 %v980, %v981
    %v983 = vrot.slane %v982, 1
    %v984 = vadd.f32 %v982, %v983
    %v985 = vadd.f32 %v969, %v971
    %v986 = vadd.f32 %v985, %v973
    %v987 = vadd.f32 %v986, %v975
    %v988 = vrot.slane %v987, 4
    %v989 = vadd.f32 %v987, %v988
    %v990 = vrot.slane %v989, 2
    %v991 = vadd.f32 %v989, %v990
    %v992 = vrot.slane %v991, 1
    %v993 = vadd.f32 %v991, %v992
    %v994 = vsel %vm889, %v984, 0.0
    %v995 = vsel %vm889, %v993, 0.0
    %v996 = vadd.f32 %v994, %v995
    %997 = vadd.xlane.f32.xlu0 %v996
    %v998 = vpop.xlane.xlu0 %997
    %v999 = vrot.slane %v998, 4
    %v1000 = vadd.f32 %v998, %v999
    %v1001 = vrot.slane %v1000, 2
    %v1002 = vadd.f32 %v1000, %v1001
    %v1003 = vrot.slane %v1002, 1
    %v1004 = vadd.f32 %v1002, %v1003
    %s1005 = vtos %v1004
    %v1006 = vstv %s1005
    %v1007 = vadd.f32 %v903, %v1006
    %v1008 = vmul.f32 %v984, %v984
    %v1009 = vmul.f32 %v993, %v993
    %v1010 = vsel %vm889, %v1008, 0.0
    %v1011 = vsel %vm889, %v1009, 0.0
    %v1012 = vadd.f32 %v1010, %v1011
    %1013 = vadd.xlane.f32.xlu0 %v1012
    %v1014 = vpop.xlane.xlu0 %1013
    %v1015 = vrot.slane %v1014, 4
    %v1016 = vadd.f32 %v1014, %v1015
    %v1017 = vrot.slane %v1016, 2
    %v1018 = vadd.f32 %v1016, %v1017
    %v1019 = vrot.slane %v1018, 1
    %v1020 = vadd.f32 %v1018, %v1019
    %s1021 = vtos %v1020
    %v1022 = vstv %s1021
    %v1023 = vadd.f32 %v919, %v1022
    %v1024 = vmul.f32 %v1007, 0.001953125
    %v1025 = vmul.f32 %v1023, 0.001953125
    %v1026 = vmul.f32 %v1024, %v1024
    %v1027 = vsub.f32 %v1025, %v1026
    %v1028 = vld [vmem:[#allocation2] sm:$0x1]
    %v1029 = vadd.f32 %v1027, 1e-05
    %v1030 = vrsqrt.pop %v1029
    %v1031 = vmul.f32 %v1028, %v1030
    %v1032 = vld [vmem:[#allocation3] sm:$0x1]
    %v1033 = vmul.f32 %v1024, %v1031
    %v1034 = vsub.f32 %v1032, %v1033
    %1036 = vset.pattern.permute.xlu0 0
    %1037 = vperm.xlu0 %1036, %v1031
    %v1038 = vpop.permute.xlu0 %1037
    %v1040 = vlaneseq
    %v1041 = vshrl.u32 %v1040, 7
    %v1042 = vsub.s32 0, %v1041
    %v1043 = vrot.slane %v1038, %v1042
    %v1044 = vmul.f32 %v879, %v1043
    %v1045 = vmul.f32 %v888, %v1043
    %1047 = vset.pattern.permute.xlu0 0
    %1048 = vperm.xlu0 %1047, %v1034
    %v1049 = vpop.permute.xlu0 %1048
    %v1051 = vlaneseq
    %v1052 = vshrl.u32 %v1051, 7
    %v1053 = vsub.s32 0, %v1052
    %v1054 = vrot.slane %v1049, %v1053
    %v1055 = vadd.f32 %v1044, %v1054
    %v1056 = vadd.f32 %v1045, %v1054
    %v1057 = vsub.f32 0.0, %v1055
    %v1058 = vsub.f32 0.0, %v1056
    %v1059 = vmul.f32 %v1057, 1.442695
    %v1060 = vpow.pop %v1059
    %v1061 = vmul.f32 %v1058, 1.442695
    %v1062 = vpow.pop %v1061
    %v1063 = vadd.f32 %v1060, 1.0
    %v1064 = vadd.f32 %v1062, 1.0
    %v1065 = vrcp.pop %v1063
    %v1066 = vmul.f32 1.0, %v1065
    %v1067 = vrcp.pop %v1064
    %v1068 = vmul.f32 1.0, %v1067
    %v1071 = vcombine.low %v1066, %v1068
    %v1073 = vmul.f32 %v161, %v1071
    %1074 = vst [vmem:[#allocation4] sm:$0xff] %v1073
    %v1075 = vmul.f32 %v984, %v1043
    %v1076 = vmul.f32 %v993, %v1043
    %v1077 = vadd.f32 %v1075, %v1054
    %v1078 = vadd.f32 %v1076, %v1054
    %v1079 = vsub.f32 0.0, %v1077
    %v1080 = vsub.f32 0.0, %v1078
    %v1081 = vmul.f32 %v1079, 1.442695
    %v1082 = vpow.pop %v1081
    %v1083 = vmul.f32 %v1080, 1.442695
    %v1084 = vpow.pop %v1083
    %v1085 = vadd.f32 %v1082, 1.0
    %v1086 = vadd.f32 %v1084, 1.0
    %v1087 = vrcp.pop %v1085
    %v1088 = vmul.f32 1.0, %v1087
    %v1089 = vrcp.pop %v1086
    %v1090 = vmul.f32 1.0, %v1089
    %v1091 = vld [vmem:[%s446] sm:$0xff]
    %v1094 = vcombine.low %v1088, %v1090
    %v1096 = vmul.f32 %v1091, %v1094
    %s1097 = scalar_lea.vmem [#allocation4], 8
    %1098 = vst [vmem:[%s1097] sm:$0xff] %v1096
    // Predicated region
    $region46: #{tpu_custom_call.1} parent=1 // pred_check
      _
    $region47: #{tpu_custom_call.1} parent=1 // pred_check_branch
      %1100 = sbr.rel (0) target = $region49
    $region48: #{tpu_custom_call.1} parent=1 // pred_region
      %s1102 = ssub.s32 256, 256
      %1103 = vsyncadd [#allocation5], %s1102
      %s1104 = sshll.u32 [#allocation4], 4
      %s1105 = int_to_ptr.vmem [resolvable:$true] %s1104
      %1110 = dma.vmem_to_hbm [thread:$0]  %s1105, 256, %s11, [#allocation5], 128, 128, 8
    $region49: #{tpu_custom_call.1} parent=1 // pred_fallthru
      _
    // Predicated region
    $region50: #{tpu_custom_call.1} parent=1 // pred_check
      _
    $region51: #{tpu_custom_call.1} parent=1 // pred_check_branch
      %1112 = sbr.rel (0) target = $region53
    $region52: #{tpu_custom_call.1} parent=1 // pred_region
      %1113 = dma.done [#allocation5], 256
    $region53: #{tpu_custom_call.1} parent=1 // pred_fallthru
      _
    %1114 = vsyncpa [#allocation5], 1

</llo_original>
